<compile_context>
chip_gen: v7x
topology: tpu7x:2x2x1
jax: 0.10.0
libtpu: 0.0.40
codegen_flags: <defaults>
</compile_context>

<pallas_src>
import jax
import jax.numpy as jnp
from jax.experimental import pallas as pl
from jax.experimental.pallas import tpu as pltpu

MIN_PIXEL_VAL = 0.1  # parity with the reference module (unused in forward)

_MAX_BLOCK_BYTES = 2 * 1024 * 1024  # 2 MiB blocks: 4x buffering fits v5e's 16 MiB scoped VMEM


def _copy_kernel(x_ref, o_ref):
    # Identity copy of one lane-dense (block_rows, lane) tile — the entire forward().
    o_ref[...] = x_ref[...]


def _sublane_multiple(dtype) -> int:
    itemsize = jnp.dtype(dtype).itemsize
    # f32 -> 8, bf16/f16 -> 16, int8/u8/fp8 -> 32 (packed-sublane tiling minimums)
    return max(8, 32 // max(1, itemsize))


def _choose_layout(total_elems: int, dtype):
    """Pick a lane-dense (rows, lane) view and a block-row count that fits VMEM."""
    lane = 0
    for cand in (2048, 1024, 512, 384, 256, 128):
        if total_elems % cand == 0:
            lane = cand
            break
    if lane == 0:
        return None  # cannot form a lane-dense view; caller falls back

    rows = total_elems // lane
    itemsize = jnp.dtype(dtype).itemsize
    sub = _sublane_multiple(dtype)

    max_rows = max(1, _MAX_BLOCK_BYTES // (lane * itemsize))
    if rows <= max_rows:
        block_rows = rows  # single block (equals full dim -> always legal)
    else:
        block_rows = max(sub, (max_rows // sub) * sub)
        # Keep tiling exact so every block is full-sized (no partial edge blocks).
        while rows % block_rows != 0 and block_rows > sub:
            block_rows -= sub
        if rows % block_rows != 0:
            block_rows = rows  # safe fallback: one big block
    return rows, lane, block_rows


def _identity_copy(image):
    """Lane-dense, aliased identity copy through VMEM."""
    total = image.size
    dtype = image.dtype
    nbytes = total * jnp.dtype(dtype).itemsize
    cost = pl.CostEstimate(flops=0, transcendentals=0, bytes_accessed=2 * nbytes)

    layout = _choose_layout(total, dtype)
    if layout is None:
        # Fallback: whole array as one block (last two dims equal full dims -> legal).
        out = pl.pallas_call(
            _copy_kernel,
            out_shape=jax.ShapeDtypeStruct(image.shape, dtype),
            grid=(1,),
            in_specs=[pl.BlockSpec(image.shape, lambda i: (0,) * image.ndim)],
            out_specs=pl.BlockSpec(image.shape, lambda i: (0,) * image.ndim),
            input_output_aliases={0: 0},
            cost_estimate=cost,
            compiler_params=pltpu.CompilerParams(
                dimension_semantics=("parallel",),
            ),
        )(image)
        return out

    rows, lane, block_rows = layout
    flat = image.reshape(rows, lane)

    out_flat = pl.pallas_call(
        _copy_kernel,
        out_shape=jax.ShapeDtypeStruct((rows, lane), dtype),
        grid=(rows // block_rows,),
        in_specs=[pl.BlockSpec((block_rows, lane), lambda i: (i, 0))],
        out_specs=pl.BlockSpec((block_rows, lane), lambda i: (i, 0)),
        input_output_aliases={0: 0},
        cost_estimate=cost,
        compiler_params=pltpu.CompilerParams(
            dimension_semantics=("parallel",),
        ),
    )(flat)

    return out_flat.reshape(image.shape)


def random_crop_forward(image, target=None):
    """Pallas implementation of RandomCrop.forward: returns (image, target) unchanged."""
    out = _identity_copy(image)
    # TODO(synk): the random-crop + content-threshold retry loop in __call__ uses
    # host-side torchvision RNG/control flow and is not part of forward(); not lowered.
    return out, target


if __name__ == "__main__":
    key = jax.random.PRNGKey(0)
    # Small NCHW image consistent with the module's input.
    image = jax.random.uniform(key, (2, 4, 16, 16), dtype=jnp.float32)
    target = {
        "boxes": jnp.zeros((2, 4), dtype=jnp.float32),
        "labels": jnp.zeros((2,), dtype=jnp.int32),
    }

    out_image, out_target = random_crop_forward(image, target)
    out_image = jax.block_until_ready(out_image)

    assert out_image.shape == image.shape
    assert out_image.dtype == image.dtype
    assert bool(jnp.all(out_image == image))
    assert out_target is target

    print("KERNEL_OK")
</pallas_src>

<mosaic_0001>
module attributes {stable_mosaic.version = 11 : i64} {
  func.func @_copy_kernel(%arg0: i32, %arg1: memref<1x2048xf32, #tpu.memory_space<vmem>>, %arg2: memref<1x2048xf32, #tpu.memory_space<vmem>>) attributes {dimension_semantics = [#tpu.dimension_semantics<parallel>], iteration_bounds = array<i64: 1>, scalar_prefetch = 0 : i64, scratch_operands = 0 : i64, tpu.core_type = #tpu.core_type<tc>, window_params = [{transform_indices = @transform_0, window_bounds = array<i64: 1, 2048>}, {transform_indices = @transform_1, window_bounds = array<i64: 1, 2048>}]} {
    %c0 = arith.constant 0 : index
    %c0_0 = arith.constant 0 : index
    %0 = vector.load %arg1[%c0, %c0_0] : memref<1x2048xf32, #tpu.memory_space<vmem>>, vector<1x2048xf32>
    %c0_1 = arith.constant 0 : index
    %c0_2 = arith.constant 0 : index
    %1 = vector.load %arg2[%c0_1, %c0_2] : memref<1x2048xf32, #tpu.memory_space<vmem>>, vector<1x2048xf32>
    tpu.vector_store %arg2[%c0_1, %c0_2], %0 {strides = array<i32>} : memref<1x2048xf32, #tpu.memory_space<vmem>>, vector<1x2048xf32>,
    return
  }
  func.func @transform_0(%arg0: i32) -> (i32, i32) {
    %c0_i32 = arith.constant 0 : i32
    %c0_i32_0 = arith.constant 0 : i32
    return %arg0, %c0_i32 : i32, i32
  }
  func.func @transform_1(%arg0: i32) -> (i32, i32) {
    %c0_i32 = arith.constant 0 : i32
    %c0_i32_0 = arith.constant 0 : i32
    return %arg0, %c0_i32 : i32, i32
  }
}

</mosaic_0001>

<llo_original>
// kernel: tpu_custom_call.1
$region0: #{tpu_custom_call.1}
  #allocation0 [shape = 'u32[]', space=smem, size = 0x4, offset = 0x4, fixed_abs, tag = 'smem constant byte address 0x4 - core index']
  #allocation1 [shape = 'u32[144,128]{1,0:T(1,128)}', space=vmem, size = 0x12000, scoped, tag = 'internal scratch']
  %s0 = inlined_call_operand.hbm [shape: f32[1,2048], index: 0, kind: input, shape index: {}, may-alias: {0,1}]
  %s1 = inlined_call_operand.hbm [shape: f32[1,2048], index: 1, kind: output, shape index: {}, may-alias: {0,1}]
  %s2 = sld [smem:[#allocation0]]
  $region18: #{tpu_custom_call.1} parent=0
    _
  %s4 = ssub.s32 1, %s2
  %s5 = scalar_select 0, %s4, %s2
  $region1: #{tpu_custom_call.1} parent=0
    #allocation2 [shape = 'u8[8192]{0}', space=vmem, size = 0x2000, scoped, tag = 'input window, operand 0, single buffered']
    #allocation3 [shape = 's32[1]{0}', space=sflag, size = 0x4, scoped, tag = 'scoped memory for tpu_custom_call.1']
    #allocation4 [shape = 's32[1]{0}', space=sflag, size = 0x4, scoped, tag = 'scoped memory for tpu_custom_call.1']
    #allocation5 [shape = 'u8[8192]{0}', space=vmem, size = 0x2000, scoped, tag = 'output window, operand 0, single buffered']
    %6 = vsyncpa [#allocation3], 0
    %7 = vsyncpa [#allocation4], 0
    // Predicated region
    $region2: #{tpu_custom_call.1} parent=1 // pred_check
      _
    $region3: #{tpu_custom_call.1} parent=1 // pred_check_branch
      %9 = sbr.rel (0) target = $region5
    $region4: #{tpu_custom_call.1} parent=1 // pred_region
      %s11 = ssub.s32 256, 256
      %12 = vsyncadd [#allocation3], %s11
      %s14 = sshll.u32 [#allocation2], 4
      %s15 = int_to_ptr.vmem [resolvable:$true] %s14
      %17 = dma.hbm_to_vmem [thread:$0]  %s0, 256, %s15, [#allocation3]
    $region5: #{tpu_custom_call.1} parent=1 // pred_fallthru
      _
    // Predicated region
    $region6: #{tpu_custom_call.1} parent=1 // pred_check
      _
    $region7: #{tpu_custom_call.1} parent=1 // pred_check_branch
      %19 = sbr.rel (0) target = $region9
    $region8: #{tpu_custom_call.1} parent=1 // pred_region
      %20 = dma.done [#allocation3], 256
    $region9: #{tpu_custom_call.1} parent=1 // pred_fallthru
      _
    %v21 = vld [vmem:[#allocation2] sm:$0xff]
    %v22 = vld [vmem:[#allocation2 + $0x8] sm:$0xff]
    %23 = vst [vmem:[#allocation5] sm:$0xff] %v21
    %24 = vst [vmem:[#allocation5 + $0x8] sm:$0xff] %v22
    // Predicated region
    $region10: #{tpu_custom_call.1} parent=1 // pred_check
      _
    $region11: #{tpu_custom_call.1} parent=1 // pred_check_branch
      %26 = sbr.rel (0) target = $region13
    $region12: #{tpu_custom_call.1} parent=1 // pred_region
      %s28 = ssub.s32 256, 256
      %29 = vsyncadd [#allocation4], %s28
      %s31 = sshll.u32 [#allocation5], 4
      %s32 = int_to_ptr.vmem [resolvable:$true] %s31
      %34 = dma.vmem_to_hbm [thread:$0]  %s32, 256, %s1, [#allocation4]
    $region13: #{tpu_custom_call.1} parent=1 // pred_fallthru
      _
    // Predicated region
    $region14: #{tpu_custom_call.1} parent=1 // pred_check
      _
    $region15: #{tpu_custom_call.1} parent=1 // pred_check_branch
      %36 = sbr.rel (0) target = $region17
    $region16: #{tpu_custom_call.1} parent=1 // pred_region
      %37 = dma.done [#allocation4], 256
    $region17: #{tpu_custom_call.1} parent=1 // pred_fallthru
      _
    %38 = vsyncpa [#allocation3], 1
    %39 = vsyncpa [#allocation4], 1

</llo_original>
